<compile_context>
chip_gen: v7x
topology: tpu7x:2x2x1
jax: 0.10.0
libtpu: 0.0.40
codegen_flags: <defaults>
</compile_context>

<pallas_src>
import jax
import jax.numpy as jnp
from jax.experimental import pallas as pl
from jax.experimental.pallas import tpu as pltpu

_LANES = 128
_SUBLANES = 8


def _unary_op(v):
    # Concrete element-wise unary operator under test (ReLU). Swap for
    # jnp.exp / jnp.tanh / jnp.abs / ... to test other unary operators.
    return jnp.maximum(v, 0.0)


def _const_eval_kernel(x_ref, uc_ref, o_ref):
    # op(c) was folded at trace time; only op(x) + uc remains in the hot path.
    o_ref[...] = _unary_op(x_ref[...]) + uc_ref[...]


def _to_lane_dense_2d(a, row_multiple):
    """Flatten + zero-pad `a` to a (rows, 128) slab with rows % row_multiple == 0."""
    flat = a.reshape(-1)
    n = flat.shape[0]
    tile = row_multiple * _LANES
    padded = ((n + tile - 1) // tile) * tile
    if padded != n:
        flat = jnp.pad(flat, (0, padded - n))
    return flat.reshape(padded // _LANES, _LANES), n


def const_eval_pass(x, c, *, block_rows=1024):
    """Returns unary(x) + unary(c); unary(c) is const-folded before the kernel."""
    assert x.shape == c.shape and x.dtype == c.dtype

    # --- const-eval: fold op(c) once, outside the pallas_call ---
    uc = _unary_op(c)

    # Decide padding granularity up front so the tiled path pads exactly once.
    n_elems = x.size
    rows_needed = pl.cdiv(n_elems, _LANES)
    small = rows_needed <= block_rows
    row_multiple = _SUBLANES if small else block_rows

    x2, n_valid = _to_lane_dense_2d(x, row_multiple)
    uc2, _ = _to_lane_dense_2d(uc, row_multiple)
    rows = x2.shape[0]

    if small:
        # Small input (launch-overhead bound): single whole-array VMEM block,
        # no grid scaffolding at all.
        out2 = pl.pallas_call(
            _const_eval_kernel,
            out_shape=jax.ShapeDtypeStruct((rows, _LANES), x.dtype),
            in_specs=[
                pl.BlockSpec(memory_space=pltpu.MemorySpace.VMEM),
                pl.BlockSpec(memory_space=pltpu.MemorySpace.VMEM),
            ],
            out_specs=pl.BlockSpec(memory_space=pltpu.MemorySpace.VMEM),
        )(x2, uc2)
    else:
        # Large input: tile rows; mark the axis "parallel" so it shards
        # across TensorCores (v7x megacore) and auto-pipelines HBM<->VMEM.
        grid = (rows // block_rows,)
        out2 = pl.pallas_call(
            _const_eval_kernel,
            out_shape=jax.ShapeDtypeStruct((rows, _LANES), x.dtype),
            grid=grid,
            in_specs=[
                pl.BlockSpec((block_rows, _LANES), lambda i: (i, 0)),
                pl.BlockSpec((block_rows, _LANES), lambda i: (i, 0)),
            ],
            out_specs=pl.BlockSpec((block_rows, _LANES), lambda i: (i, 0)),
            compiler_params=pltpu.CompilerParams(
                dimension_semantics=("parallel",),
            ),
        )(x2, uc2)

    return out2.reshape(-1)[:n_valid].reshape(x.shape)


def reference(x, c):
    return _unary_op(x) + _unary_op(c)


if __name__ == "__main__":
    shape = (2, 4, 16, 16)  # NCHW, total elems = 2048 = 16 * 128
    key = jax.random.PRNGKey(0)
    kx, kc = jax.random.split(key)

    x = jax.random.normal(kx, shape, dtype=jnp.float32)
    # module __init__: c = (torch.rand(shape) - 0.5)  -> uniform in [-0.5, 0.5)
    c = jax.random.uniform(kc, shape, dtype=jnp.float32) - 0.5

    ref = reference(x, c)

    # Small-input path (single block, no grid).
    out = jax.block_until_ready(const_eval_pass(x, c))
    assert out.shape == shape and out.dtype == x.dtype
    assert jnp.allclose(out, ref, atol=1e-6, rtol=1e-6)

    # Exercise the tiled / parallel-grid path cheaply (block_rows=8 -> grid=(2,)).
    out_tiled = jax.block_until_ready(const_eval_pass(x, c, block_rows=8))
    assert jnp.allclose(out_tiled, ref, atol=1e-6, rtol=1e-6)

    print("KERNEL_OK")
</pallas_src>

<mosaic_0001>
module attributes {stable_mosaic.version = 11 : i64} {
  func.func @_const_eval_kernel(%arg0: memref<16x128xf32, #tpu.memory_space<vmem>>, %arg1: memref<16x128xf32, #tpu.memory_space<vmem>>, %arg2: memref<16x128xf32, #tpu.memory_space<vmem>>) attributes {dimension_semantics = [], scalar_prefetch = 0 : i64, scratch_operands = 0 : i64, tpu.core_type = #tpu.core_type<tc>} {
    %c0 = arith.constant 0 : index
    %c0_0 = arith.constant 0 : index
    %0 = vector.load %arg0[%c0, %c0_0] : memref<16x128xf32, #tpu.memory_space<vmem>>, vector<16x128xf32>
    %cst = arith.constant 0.000000e+00 : f32
    %1 = vector.broadcast %cst : f32 to vector<16x128xf32>
    %2 = arith.maximumf %0, %1 : vector<16x128xf32>
    %c0_1 = arith.constant 0 : index
    %c0_2 = arith.constant 0 : index
    %3 = vector.load %arg1[%c0_1, %c0_2] : memref<16x128xf32, #tpu.memory_space<vmem>>, vector<16x128xf32>
    %4 = arith.addf %2, %3 : vector<16x128xf32>
    %c0_3 = arith.constant 0 : index
    %c0_4 = arith.constant 0 : index
    %5 = vector.load %arg2[%c0_3, %c0_4] : memref<16x128xf32, #tpu.memory_space<vmem>>, vector<16x128xf32>
    tpu.vector_store %arg2[%c0_3, %c0_4], %4 {strides = array<i32>} : memref<16x128xf32, #tpu.memory_space<vmem>>, vector<16x128xf32>,
    return
  }
}

</mosaic_0001>

<llo_original>
// kernel: tpu_custom_call.1
$region0: #{tpu_custom_call.1}
  #allocation0 [shape = 'u32[]', space=smem, size = 0x4, offset = 0x4, fixed_abs, tag = 'smem constant byte address 0x4 - core index']
  #allocation1 [shape = 'u32[144,128]{1,0:T(1,128)}', space=vmem, size = 0x12000, scoped, tag = 'internal scratch']
  %s0 = inlined_call_operand.hbm [shape: f32[16,128], index: 0, kind: input, shape index: {}]
  %s1 = inlined_call_operand.hbm [shape: f32[16,128], index: 1, kind: input, shape index: {}]
  %s2 = inlined_call_operand.hbm [shape: f32[16,128], index: 2, kind: output, shape index: {}]
  %s3 = sld [smem:[#allocation0]]
  $region26: #{tpu_custom_call.1} parent=0
    _
  %s5 = ssub.s32 1, %s3
  %s6 = scalar_select 0, %s5, %s3
  $region1: #{tpu_custom_call.1} parent=0
    #allocation2 [shape = 'u8[8192]{0}', space=vmem, size = 0x2000, scoped, tag = 'input window, operand 0, single buffered']
    #allocation3 [shape = 's32[1]{0}', space=sflag, size = 0x4, scoped, tag = 'scoped memory for tpu_custom_call.1']
    #allocation4 [shape = 's32[1]{0}', space=sflag, size = 0x4, scoped, tag = 'scoped memory for tpu_custom_call.1']
    #allocation5 [shape = 'u8[8192]{0}', space=vmem, size = 0x2000, scoped, tag = 'input window, operand 1, single buffered']
    #allocation6 [shape = 's32[1]{0}', space=sflag, size = 0x4, scoped, tag = 'scoped memory for tpu_custom_call.1']
    #allocation7 [shape = 'u8[8192]{0}', space=vmem, size = 0x2000, scoped, tag = 'output window, operand 0, single buffered']
    %7 = vsyncpa [#allocation3], 0
    %8 = vsyncpa [#allocation6], 0
    %9 = vsyncpa [#allocation4], 0
    // Predicated region
    $region2: #{tpu_custom_call.1} parent=1 // pred_check
      _
    $region3: #{tpu_custom_call.1} parent=1 // pred_check_branch
      %11 = sbr.rel (0) target = $region5
    $region4: #{tpu_custom_call.1} parent=1 // pred_region
      %s13 = ssub.s32 256, 256
      %14 = vsyncadd [#allocation3], %s13
      %s15 = sshll.u32 [#allocation2], 4
      %s16 = int_to_ptr.vmem [resolvable:$true] %s15
      %21 = dma.hbm_to_vmem [thread:$0]  %s0, 256, %s16, [#allocation3], 128, 128, 8
    $region5: #{tpu_custom_call.1} parent=1 // pred_fallthru
      _
    // Predicated region
    $region6: #{tpu_custom_call.1} parent=1 // pred_check
      _
    $region7: #{tpu_custom_call.1} parent=1 // pred_check_branch
      %23 = sbr.rel (0) target = $region9
    $region8: #{tpu_custom_call.1} parent=1 // pred_region
      %s25 = ssub.s32 256, 256
      %26 = vsyncadd [#allocation6], %s25
      %s27 = sshll.u32 [#allocation5], 4
      %s28 = int_to_ptr.vmem [resolvable:$true] %s27
      %33 = dma.hbm_to_vmem [thread:$0]  %s1, 256, %s28, [#allocation6], 128, 128, 8
    $region9: #{tpu_custom_call.1} parent=1 // pred_fallthru
      _
    // Predicated region
    $region10: #{tpu_custom_call.1} parent=1 // pred_check
      _
    $region11: #{tpu_custom_call.1} parent=1 // pred_check_branch
      %35 = sbr.rel (0) target = $region13
    $region12: #{tpu_custom_call.1} parent=1 // pred_region
      %36 = dma.done [#allocation3], 256
    $region13: #{tpu_custom_call.1} parent=1 // pred_fallthru
      _
    // Predicated region
    $region14: #{tpu_custom_call.1} parent=1 // pred_check
      _
    $region15: #{tpu_custom_call.1} parent=1 // pred_check_branch
      %38 = sbr.rel (0) target = $region17
    $region16: #{tpu_custom_call.1} parent=1 // pred_region
      %39 = dma.done [#allocation6], 256
    $region17: #{tpu_custom_call.1} parent=1 // pred_fallthru
      _
    %v40 = vld [vmem:[#allocation2] sm:$0xff]
    %v41 = vld [vmem:[#allocation2 + $0x8] sm:$0xff]
    %v42 = vmax.f32 %v40, 0.0
    %v43 = vmax.f32 %v41, 0.0
    %v44 = vld [vmem:[#allocation5] sm:$0xff]
    %v45 = vld [vmem:[#allocation5 + $0x8] sm:$0xff]
    %v46 = vadd.f32 %v42, %v44
    %v47 = vadd.f32 %v43, %v45
    %48 = vst [vmem:[#allocation7] sm:$0xff] %v46
    %49 = vst [vmem:[#allocation7 + $0x8] sm:$0xff] %v47
    // Predicated region
    $region18: #{tpu_custom_call.1} parent=1 // pred_check
      _
    $region19: #{tpu_custom_call.1} parent=1 // pred_check_branch
      %51 = sbr.rel (0) target = $region21
    $region20: #{tpu_custom_call.1} parent=1 // pred_region
      %s53 = ssub.s32 256, 256
      %54 = vsyncadd [#allocation4], %s53
      %s55 = sshll.u32 [#allocation7], 4
      %s56 = int_to_ptr.vmem [resolvable:$true] %s55
      %61 = dma.vmem_to_hbm [thread:$0]  %s56, 256, %s2, [#allocation4], 128, 128, 8
    $region21: #{tpu_custom_call.1} parent=1 // pred_fallthru
      _
    // Predicated region
    $region22: #{tpu_custom_call.1} parent=1 // pred_check
      _
    $region23: #{tpu_custom_call.1} parent=1 // pred_check_branch
      %63 = sbr.rel (0) target = $region25
    $region24: #{tpu_custom_call.1} parent=1 // pred_region
      %64 = dma.done [#allocation4], 256
    $region25: #{tpu_custom_call.1} parent=1 // pred_fallthru
      _
    %65 = vsyncpa [#allocation3], 1
    %66 = vsyncpa [#allocation6], 1
    %67 = vsyncpa [#allocation4], 1

</llo_original>
